<compile_context>
chip_gen: v5e
topology: v5e:2x2
jax: 0.10.0
libtpu: 0.0.40
codegen_flags: <defaults>
</compile_context>

<pallas_src>
import jax
import jax.numpy as jnp
import numpy as np
from jax.experimental import pallas as pl
from jax.experimental.pallas import tpu as pltpu

N = 12          # graph nodes
C_IN = 3        # in_features
C_OUT = 12      # out_features
K = 3           # Chebyshev terms (torch ChebConv(K=2) -> K+1 = 3 polynomials)
NC = N * C_IN   # 36  flattened (node, channel)
NF = N * C_OUT  # 144 flattened (node, feature)


# ---------------- plain-JAX graph / parameter setup (glue, runs once) ----------------

def get_laplacian(adj):
    # normalized Laplacian: L = I - D^{-1/2} A D^{-1/2}
    d_inv_sqrt = jnp.sum(adj, axis=-1) ** (-0.5)
    D = jnp.diag(d_inv_sqrt)
    return jnp.eye(adj.shape[0], dtype=adj.dtype) - D @ adj @ D


def cheb_polynomials(L):
    # T0 = I, T1 = L, T2 = 2 L^2 - I
    I = jnp.eye(L.shape[0], dtype=L.dtype)
    return jnp.stack([I, L, 2.0 * (L @ L) - I], axis=0)   # [K, N, N]


def build_kernel_params(adjs_used, gw, gb, fc_w, fc_b):
    """Fold graph operators, Chebyshev weights and the fc into flat-layout matrices.

    adjs_used : 3 adjacency matrices actually used by gconv1..3 (hop1, hop2, hop2)
    gw[g]     : [K, C_IN, C_OUT] Chebyshev weights of gconv g
    gb[g]     : [C_OUT]          bias of gconv g
    fc_w      : [NF, 3*NF]       torch Linear weight (out, in)
    fc_b      : [NF]

    Returns
      M        [3, 36, 144]  fused gconv operators (Kronecker mixed-product fold)
      bias     [3, 1, 144]   gconv biases in flat layout
      Z        [36, 144]     fc folded through the gconv operators
      fcb_eff  [1, 144]      fc bias including the gconv-bias contribution
    """
    hp = jax.lax.Precision.HIGHEST  # setup-time only, off the hot path
    Ms = []
    for g in range(3):
        T = cheb_polynomials(get_laplacian(adjs_used[g]))            # [K, N, N]
        # (T_k @ X) @ W_k in flat layout:  xf @ kron(T_k^T, W_k)
        Mg = sum(jnp.kron(T[k].T, gw[g][k]) for k in range(K))       # [36, 144]
        Ms.append(Mg)
    M = jnp.stack(Ms)                                                # [3, 36, 144]
    bias = jnp.stack([jnp.tile(gb[g], N)[None, :] for g in range(3)])  # [3, 1, 144]

    # fc split per concatenated gconv block, transposed to input-major [144, 144]
    fcw = [fc_w[:, g * NF:(g + 1) * NF].T for g in range(3)]
    # z0 = sum_g (xf @ M_g + b_g) @ fcw_g + fc_b  ==  xf @ Z + fcb_eff
    Z = sum(jnp.dot(M[g], fcw[g], precision=hp) for g in range(3))   # [36, 144]
    fcb_eff = fc_b[None, :] + sum(jnp.dot(bias[g], fcw[g], precision=hp)
                                  for g in range(3))                 # [1, 144]
    return M, bias, Z, fcb_eff


# ---------------- Pallas kernel (hot path: 4 small matmuls + gating + ReLU) ----------------

def chebgac_kernel(xf_ref, m_ref, bias_ref, z_ref, fcb_ref, o_ref):
    xf = xf_ref[...]                                                  # [TB, 36]
    # gconv outputs (one fused matmul each, thanks to the Kronecker fold)
    x0 = jnp.dot(xf, m_ref[0], preferred_element_type=jnp.float32) + bias_ref[0]
    x1 = jnp.dot(xf, m_ref[1], preferred_element_type=jnp.float32) + bias_ref[1]
    x2 = jnp.dot(xf, m_ref[2], preferred_element_type=jnp.float32) + bias_ref[2]
    # fc over concat([X0, X1, X2]) folded into a single [TB,36]x[36,144] matmul
    z0 = jnp.dot(xf, z_ref[...], preferred_element_type=jnp.float32) + fcb_ref[...]
    o_ref[...] = jnp.maximum(z0 + x0 * x1 + x1 * x2, 0.0)            # ReLU(z0 + z1 + z2)


def chebgac_forward(X, M, bias, Z, fcb_eff):
    B = X.shape[0]
    xf = X.reshape(B, NC).astype(jnp.float32)          # wrapper-side flatten (glue)

    # Batch tiling: weights are tiny (<100 KB) and stay VMEM-resident; the batch axis is
    # a "parallel" grid dim so v7x's two TensorCores split it and xf/out double-buffer.
    TB = 512
    if B <= TB:
        TB, Bp = B, B
    else:
        Bp = pl.cdiv(B, TB) * TB
        if Bp != B:
            xf = jnp.pad(xf, ((0, Bp - B), (0, 0)))
    grid = (Bp // TB,)
    # TODO(synk): at B~2 this call is launch/latency-bound (MXU M-dim is 2); batch more
    # independent graphs per call to amortize overhead.

    out_flat = pl.pallas_call(
        chebgac_kernel,
        out_shape=jax.ShapeDtypeStruct((Bp, NF), jnp.float32),
        grid=grid,
        in_specs=[
            pl.BlockSpec((TB, NC), lambda i: (i, 0)),        # streamed batch tile
            pl.BlockSpec((3, NC, NF), lambda i: (0, 0, 0)),  # resident weights
            pl.BlockSpec((3, 1, NF), lambda i: (0, 0, 0)),
            pl.BlockSpec((NC, NF), lambda i: (0, 0)),
            pl.BlockSpec((1, NF), lambda i: (0, 0)),
        ],
        out_specs=pl.BlockSpec((TB, NF), lambda i: (i, 0)),
        compiler_params=pltpu.CompilerParams(dimension_semantics=("parallel",)),
    )(xf, M, bias, Z, fcb_eff)
    return out_flat[:B].reshape(B, N, C_OUT)            # wrapper-side view to [B, 12, 12]


chebgac_forward_jit = jax.jit(chebgac_forward)


# ---------------- pure-JAX reference (mirrors the torch module, full f32) ----------------

def chebconv_ref(X, adj, W, b):
    T = cheb_polynomials(get_laplacian(adj))                              # [K, N, N]
    hp = jax.lax.Precision.HIGHEST
    res = jnp.einsum('kmp,bpc->kbmc', T, X, precision=hp)                 # T_k @ X
    res = jnp.einsum('kbmc,kcf->kbmf', res, W, precision=hp)              # ... @ W_k
    return res.sum(0) + b[None, None, :]


def chebgac_ref(X, adj1, adj2, gw, gb, fc_w, fc_b):
    hp = jax.lax.Precision.HIGHEST
    X0 = chebconv_ref(X, adj1, gw[0], gb[0])
    X1 = chebconv_ref(X, adj2, gw[1], gb[1])
    X2 = chebconv_ref(X, adj2, gw[2], gb[2])    # original code uses hop2 here too
    x = jnp.concatenate([X0, X1, X2], axis=1).reshape(X.shape[0], 3 * NF)
    z0 = (jnp.dot(x, fc_w.T, precision=hp) + fc_b).reshape(X.shape[0], N, C_OUT)
    return jnp.maximum(z0 + X0 * X1 + X1 * X2, 0.0)


# ---------------- main ----------------

if __name__ == "__main__":
    keys = jax.random.split(jax.random.PRNGKey(0), 16)
    B = 2

    X = jax.random.normal(keys[0], (B, N, C_IN), dtype=jnp.float32)

    def make_adj(k):
        a = jax.random.uniform(k, (N, N), dtype=jnp.float32)
        return 0.5 * (a + a.T) + jnp.eye(N, dtype=jnp.float32)   # symmetric, positive degrees

    adj1 = make_adj(keys[1])
    adj2 = make_adj(keys[2])
    adj3 = make_adj(keys[3])    # unused by the original forward; kept for interface parity

    # ChebConv params: weight [K, C_IN, C_OUT] (torch [K+1, 1, in, out] squeezed), bias [C_OUT]
    xav = (2.0 / (C_IN + C_OUT)) ** 0.5
    gw = [xav * jax.random.normal(keys[4 + g], (K, C_IN, C_OUT), dtype=jnp.float32)
          for g in range(3)]
    gb = [0.05 * jax.random.normal(keys[7 + g], (C_OUT,), dtype=jnp.float32)
          for g in range(3)]

    # fc: Linear(3*N*C_OUT -> N*C_OUT)
    fc_w = (1.0 / np.sqrt(3 * NF)) * jax.random.normal(keys[10], (NF, 3 * NF), dtype=jnp.float32)
    fc_b = (1.0 / np.sqrt(3 * NF)) * jax.random.normal(keys[11], (NF,), dtype=jnp.float32)

    # build fused flat-layout operators (gconv1->hop1, gconv2->hop2, gconv3->hop2)
    M, bias, Z, fcb_eff = build_kernel_params([adj1, adj2, adj2], gw, gb, fc_w, fc_b)

    out = chebgac_forward_jit(X, M, bias, Z, fcb_eff)
    out = jax.block_until_ready(out)

    ref = chebgac_ref(X, adj1, adj2, gw, gb, fc_w, fc_b)
    ref = jax.block_until_ready(ref)

    assert out.shape == (B, N, C_OUT), out.shape

    out_np = np.asarray(out)
    ref_np = np.asarray(ref)
    # Kernel uses default-precision (single-pass bf16) MXU matmuls; accept errors up to
    # 1% of the output dynamic range vs. the full-f32 reference.
    scale = max(float(np.max(np.abs(ref_np))), 1.0)
    max_err = float(np.max(np.abs(out_np - ref_np)))
    if max_err > 1e-2 * scale:
        raise AssertionError(
            f"Pallas kernel output does not match JAX reference: "
            f"max_err={max_err:.4e}, scale={scale:.4e}")

    print("KERNEL_OK")
</pallas_src>

<mosaic_0001>
module attributes {stable_mosaic.version = 11 : i64} {
  func.func @chebgac_kernel(%arg0: i32, %arg1: memref<2x36xf32, #tpu.memory_space<vmem>>, %arg2: memref<3x36x144xf32, #tpu.memory_space<vmem>>, %arg3: memref<3x1x144xf32, #tpu.memory_space<vmem>>, %arg4: memref<36x144xf32, #tpu.memory_space<vmem>>, %arg5: memref<1x144xf32, #tpu.memory_space<vmem>>, %arg6: memref<2x144xf32, #tpu.memory_space<vmem>>) attributes {dimension_semantics = [#tpu.dimension_semantics<parallel>], iteration_bounds = array<i64: 1>, scalar_prefetch = 0 : i64, scratch_operands = 0 : i64, tpu.core_type = #tpu.core_type<tc>, window_params = [{transform_indices = @transform_0, window_bounds = array<i64: 2, 36>}, {pipeline_mode = #tpu.pipeline_mode<synchronous>, transform_indices = @transform_1, window_bounds = array<i64: 3, 36, 144>}, {pipeline_mode = #tpu.pipeline_mode<synchronous>, transform_indices = @transform_2, window_bounds = array<i64: 3, 1, 144>}, {pipeline_mode = #tpu.pipeline_mode<synchronous>, transform_indices = @transform_3, window_bounds = array<i64: 36, 144>}, {pipeline_mode = #tpu.pipeline_mode<synchronous>, transform_indices = @transform_4, window_bounds = array<i64: 1, 144>}, {transform_indices = @transform_5, window_bounds = array<i64: 2, 144>}]} {
    %c0 = arith.constant 0 : index
    %c0_0 = arith.constant 0 : index
    %0 = vector.load %arg1[%c0, %c0_0] : memref<2x36xf32, #tpu.memory_space<vmem>>, vector<2x36xf32>
    %c0_1 = arith.constant 0 : index
    %c0_2 = arith.constant 0 : index
    %c0_3 = arith.constant 0 : index
    %1 = vector.load %arg2[%c0_1, %c0_2, %c0_3] : memref<3x36x144xf32, #tpu.memory_space<vmem>>, vector<1x36x144xf32>
    %2 = vector.shape_cast %1 : vector<1x36x144xf32> to vector<36x144xf32>
    %cst = arith.constant dense<0.000000e+00> : vector<2x144xf32>
    %3 = tpu.matmul %0, %2, %cst {dimension_numbers = #tpu.dot_dimension_numbers<[1], [0], [0], [1], [0, 0, 1, 1], [], []>} : vector<2x36xf32>, vector<36x144xf32>, vector<2x144xf32> -> vector<2x144xf32>
    %c0_4 = arith.constant 0 : index
    %c0_5 = arith.constant 0 : index
    %c0_6 = arith.constant 0 : index
    %4 = vector.load %arg3[%c0_4, %c0_5, %c0_6] : memref<3x1x144xf32, #tpu.memory_space<vmem>>, vector<1x1x144xf32>
    %5 = vector.shape_cast %4 : vector<1x1x144xf32> to vector<1x144xf32>
    %6 = vector.broadcast %5 : vector<1x144xf32> to vector<2x144xf32>
    %7 = arith.addf %3, %6 : vector<2x144xf32>
    %c1 = arith.constant 1 : index
    %c0_7 = arith.constant 0 : index
    %c0_8 = arith.constant 0 : index
    %8 = vector.load %arg2[%c1, %c0_7, %c0_8] : memref<3x36x144xf32, #tpu.memory_space<vmem>>, vector<1x36x144xf32>
    %9 = vector.shape_cast %8 : vector<1x36x144xf32> to vector<36x144xf32>
    %cst_9 = arith.constant dense<0.000000e+00> : vector<2x144xf32>
    %10 = tpu.matmul %0, %9, %cst_9 {dimension_numbers = #tpu.dot_dimension_numbers<[1], [0], [0], [1], [0, 0, 1, 1], [], []>} : vector<2x36xf32>, vector<36x144xf32>, vector<2x144xf32> -> vector<2x144xf32>
    %c1_10 = arith.constant 1 : index
    %c0_11 = arith.constant 0 : index
    %c0_12 = arith.constant 0 : index
    %11 = vector.load %arg3[%c1_10, %c0_11, %c0_12] : memref<3x1x144xf32, #tpu.memory_space<vmem>>, vector<1x1x144xf32>
    %12 = vector.shape_cast %11 : vector<1x1x144xf32> to vector<1x144xf32>
    %13 = vector.broadcast %12 : vector<1x144xf32> to vector<2x144xf32>
    %14 = arith.addf %10, %13 : vector<2x144xf32>
    %c2 = arith.constant 2 : index
    %c0_13 = arith.constant 0 : index
    %c0_14 = arith.constant 0 : index
    %15 = vector.load %arg2[%c2, %c0_13, %c0_14] : memref<3x36x144xf32, #tpu.memory_space<vmem>>, vector<1x36x144xf32>
    %16 = vector.shape_cast %15 : vector<1x36x144xf32> to vector<36x144xf32>
    %cst_15 = arith.constant dense<0.000000e+00> : vector<2x144xf32>
    %17 = tpu.matmul %0, %16, %cst_15 {dimension_numbers = #tpu.dot_dimension_numbers<[1], [0], [0], [1], [0, 0, 1, 1], [], []>} : vector<2x36xf32>, vector<36x144xf32>, vector<2x144xf32> -> vector<2x144xf32>
    %c2_16 = arith.constant 2 : index
    %c0_17 = arith.constant 0 : index
    %c0_18 = arith.constant 0 : index
    %18 = vector.load %arg3[%c2_16, %c0_17, %c0_18] : memref<3x1x144xf32, #tpu.memory_space<vmem>>, vector<1x1x144xf32>
    %19 = vector.shape_cast %18 : vector<1x1x144xf32> to vector<1x144xf32>
    %20 = vector.broadcast %19 : vector<1x144xf32> to vector<2x144xf32>
    %21 = arith.addf %17, %20 : vector<2x144xf32>
    %c0_19 = arith.constant 0 : index
    %c0_20 = arith.constant 0 : index
    %22 = vector.load %arg4[%c0_19, %c0_20] : memref<36x144xf32, #tpu.memory_space<vmem>>, vector<36x144xf32>
    %cst_21 = arith.constant dense<0.000000e+00> : vector<2x144xf32>
    %23 = tpu.matmul %0, %22, %cst_21 {dimension_numbers = #tpu.dot_dimension_numbers<[1], [0], [0], [1], [0, 0, 1, 1], [], []>} : vector<2x36xf32>, vector<36x144xf32>, vector<2x144xf32> -> vector<2x144xf32>
    %c0_22 = arith.constant 0 : index
    %c0_23 = arith.constant 0 : index
    %24 = vector.load %arg5[%c0_22, %c0_23] : memref<1x144xf32, #tpu.memory_space<vmem>>, vector<1x144xf32>
    %25 = vector.broadcast %24 : vector<1x144xf32> to vector<2x144xf32>
    %26 = arith.addf %23, %25 : vector<2x144xf32>
    %27 = arith.mulf %7, %14 : vector<2x144xf32>
    %28 = arith.addf %26, %27 : vector<2x144xf32>
    %29 = arith.mulf %14, %21 : vector<2x144xf32>
    %30 = arith.addf %28, %29 : vector<2x144xf32>
    %cst_24 = arith.constant 0.000000e+00 : f32
    %31 = vector.broadcast %cst_24 : f32 to vector<2x144xf32>
    %32 = arith.maximumf %30, %31 : vector<2x144xf32>
    %c0_25 = arith.constant 0 : index
    %c0_26 = arith.constant 0 : index
    %33 = vector.load %arg6[%c0_25, %c0_26] : memref<2x144xf32, #tpu.memory_space<vmem>>, vector<2x144xf32>
    tpu.vector_store %arg6[%c0_25, %c0_26], %32 {strides = array<i32>} : memref<2x144xf32, #tpu.memory_space<vmem>>, vector<2x144xf32>,
    return
  }
  func.func @transform_0(%arg0: i32) -> (i32, i32) {
    %c0_i32 = arith.constant 0 : i32
    %c0_i32_0 = arith.constant 0 : i32
    return %arg0, %c0_i32 : i32, i32
  }
  func.func @transform_1(%arg0: i32) -> (i32, i32, i32) {
    %c0_i32 = arith.constant 0 : i32
    %c0_i32_0 = arith.constant 0 : i32
    %c0_i32_1 = arith.constant 0 : i32
    %c0_i32_2 = arith.constant 0 : i32
    return %c0_i32, %c0_i32_0, %c0_i32_1 : i32, i32, i32
  }
  func.func @transform_2(%arg0: i32) -> (i32, i32, i32) {
    %c0_i32 = arith.constant 0 : i32
    %c0_i32_0 = arith.constant 0 : i32
    %c0_i32_1 = arith.constant 0 : i32
    %c0_i32_2 = arith.constant 0 : i32
    return %c0_i32, %c0_i32_0, %c0_i32_1 : i32, i32, i32
  }
  func.func @transform_3(%arg0: i32) -> (i32, i32) {
    %c0_i32 = arith.constant 0 : i32
    %c0_i32_0 = arith.constant 0 : i32
    %c0_i32_1 = arith.constant 0 : i32
    return %c0_i32, %c0_i32_0 : i32, i32
  }
  func.func @transform_4(%arg0: i32) -> (i32, i32) {
    %c0_i32 = arith.constant 0 : i32
    %c0_i32_0 = arith.constant 0 : i32
    %c0_i32_1 = arith.constant 0 : i32
    return %c0_i32, %c0_i32_0 : i32, i32
  }
  func.func @transform_5(%arg0: i32) -> (i32, i32) {
    %c0_i32 = arith.constant 0 : i32
    %c0_i32_0 = arith.constant 0 : i32
    return %arg0, %c0_i32 : i32, i32
  }
}

</mosaic_0001>

<llo_original>
// kernel: chebgac_forward.1
$region0: #{chebgac_forward.1}
  #allocation0 [shape = 'u32[]', space=smem, size = 0x4, offset = 0x4, fixed_abs, tag = 'smem constant byte address 0x4 - core index']
  #allocation1 [shape = 'u32[72,128]{1,0:T(1,128)}', space=vmem, size = 0x9000, scoped, tag = 'internal scratch']
  %s0 = inlined_call_operand.vmem [shape: f32[2,36], index: 0, kind: input, shape index: {}]
  %s1 = inlined_call_operand.hbm [shape: f32[3,36,144], index: 1, kind: input, shape index: {}]
  %s2 = inlined_call_operand.vmem [shape: f32[3,1,144], index: 2, kind: input, shape index: {}]
  %s3 = inlined_call_operand.hbm [shape: f32[36,144], index: 3, kind: input, shape index: {}]
  %s4 = inlined_call_operand.vmem [shape: f32[1,144], index: 4, kind: input, shape index: {}]
  %s5 = inlined_call_operand.vmem [shape: f32[2,144], index: 5, kind: output, shape index: {}]
  %s6 = sld [smem:[#allocation0]]
  $region38: #{chebgac_forward.1} parent=0
    _
  %s8 = ssub.s32 1, %s6
  %s9 = scalar_select 0, %s8, %s6
  $region1: #{chebgac_forward.1} parent=0
    #allocation2 [shape = 'u8[122880]{0}', space=vmem, size = 0x1e000, scoped, tag = 'input window, operand 1, single buffered']
    #allocation3 [shape = 's32[1]{0}', space=sflag, size = 0x4, scoped, tag = 'scoped memory for chebgac_forward.1']
    #allocation4 [shape = 'u8[40960]{0}', space=vmem, size = 0xa000, scoped, tag = 'input window, operand 3, single buffered']
    #allocation5 [shape = 's32[1]{0}', space=sflag, size = 0x4, scoped, tag = 'scoped memory for chebgac_forward.1']
    %10 = vsyncpa [#allocation3], 0
    %11 = vsyncpa [#allocation5], 0
    // Predicated region
    $region2: #{chebgac_forward.1} parent=1 // pred_check
      _
    $region3: #{chebgac_forward.1} parent=1 // pred_check_branch
      %13 = sbr.rel (0) target = $region5
    $region4: #{chebgac_forward.1} parent=1 // pred_region
      _
    $region5: #{chebgac_forward.1} parent=1 // pred_fallthru
      _
    // Predicated region
    $region6: #{chebgac_forward.1} parent=1 // pred_check
      _
    $region7: #{chebgac_forward.1} parent=1 // pred_check_branch
      %15 = sbr.rel (0) target = $region9
    $region8: #{chebgac_forward.1} parent=1 // pred_region
      %17 = vsyncadd [#allocation3], 0
      %s18 = sshll.u32 %s1, 4
      %s19 = int_to_ptr.hbm [resolvable:$true] %s18
      %s20 = sshll.u32 [#allocation2], 4
      %s21 = int_to_ptr.vmem [resolvable:$true] %s20
      %26 = dma.hbm_to_vmem [thread:$0]  %s19, 3840, %s21, [#allocation3], 256, 256, 16
    $region9: #{chebgac_forward.1} parent=1 // pred_fallthru
      _
    // Predicated region
    $region10: #{chebgac_forward.1} parent=1 // pred_check
      _
    $region11: #{chebgac_forward.1} parent=1 // pred_check_branch
      %28 = sbr.rel (0) target = $region13
    $region12: #{chebgac_forward.1} parent=1 // pred_region
      _
    $region13: #{chebgac_forward.1} parent=1 // pred_fallthru
      _
    // Predicated region
    $region14: #{chebgac_forward.1} parent=1 // pred_check
      _
    $region15: #{chebgac_forward.1} parent=1 // pred_check_branch
      %30 = sbr.rel (0) target = $region17
    $region16: #{chebgac_forward.1} parent=1 // pred_region
      %32 = vsyncadd [#allocation5], 0
      %s33 = sshll.u32 %s3, 4
      %s34 = int_to_ptr.hbm [resolvable:$true] %s33
      %s35 = sshll.u32 [#allocation4], 4
      %s36 = int_to_ptr.vmem [resolvable:$true] %s35
      %41 = dma.hbm_to_vmem [thread:$0]  %s34, 1280, %s36, [#allocation5], 256, 256, 16
    $region17: #{chebgac_forward.1} parent=1 // pred_fallthru
      _
    // Predicated region
    $region18: #{chebgac_forward.1} parent=1 // pred_check
      _
    $region19: #{chebgac_forward.1} parent=1 // pred_check_branch
      %43 = sbr.rel (0) target = $region21
    $region20: #{chebgac_forward.1} parent=1 // pred_region
      _
    $region21: #{chebgac_forward.1} parent=1 // pred_fallthru
      _
    // Predicated region
    $region22: #{chebgac_forward.1} parent=1 // pred_check
      _
    $region23: #{chebgac_forward.1} parent=1 // pred_check_branch
      %45 = sbr.rel (0) target = $region25
    $region24: #{chebgac_forward.1} parent=1 // pred_region
      %47 = dma.done [#allocation3], 3840
    $region25: #{chebgac_forward.1} parent=1 // pred_fallthru
      _
    // Predicated region
    $region26: #{chebgac_forward.1} parent=1 // pred_check
      _
    $region27: #{chebgac_forward.1} parent=1 // pred_check_branch
      %49 = sbr.rel (0) target = $region29
    $region28: #{chebgac_forward.1} parent=1 // pred_region
      %51 = dma.done [#allocation5], 1280
    $region29: #{chebgac_forward.1} parent=1 // pred_fallthru
      _
    %v52 = vld [vmem:[%s0] sm:$0x3]
    %v53 = vld [vmem:[#allocation2] sm:$0xff]
    %v54 = vld [vmem:[#allocation2 + $0x8] sm:$0xff]
    %v55 = vld [vmem:[#allocation2 + $0x10] sm:$0xff]
    %v56 = vld [vmem:[#allocation2 + $0x18] sm:$0xff]
    %v57 = vld [vmem:[#allocation2 + $0x20] sm:$0xff]
    %v58 = vld [vmem:[#allocation2 + $0x28] sm:$0xff]
    %v59 = vld [vmem:[#allocation2 + $0x30] sm:$0xff]
    %v60 = vld [vmem:[#allocation2 + $0x38] sm:$0xff]
    %v61 = vld [vmem:[#allocation2 + $0x40] sm:$0xf]
    %v62 = vld [vmem:[#allocation2 + $0x48] sm:$0xf]
    %v63 = vld [vmem:[%s2] sm:$0x3]
    %v65 = vperm.slane %v63, 0
    %v66 = vperm.slane %v63, 1
    %vm69 = vcmask 293888
    %v71 = vsel %vm69, %v52, 0
    %vm73 = vcmask 1043456
    %v75 = vsel %vm73, %v61, 0
    %v78 = vsel %vm73, %v62, 0
    %80 = vmatpush.msra.mxu0 0.0
    %81 = vmatpush.msra.mxu0 0.0
    %82 = vmatpush.msra.mxu0 0.0
    %83 = vmatpush.msra.mxu0 0.0
    %84 = vmatpush.msra.mxu0 0.0
    %85 = vmatpush.msra.mxu0 0.0
    %86 = vmatpush.msra.mxu0 0.0
    %87 = vmatpush.msra.mxu0 0.0
    %88 = vmatpush.msra.mxu0 0.0
    %89 = vmatpush.msra.mxu0 0.0
    %90 = vmatpush.msra.mxu0 0.0
    %91 = vmatpush.msra.mxu0 %v75
    %92 = vmatpush.msra.mxu0 %v59
    %93 = vmatpush.msra.mxu0 %v57
    %94 = vmatpush.msra.mxu0 %v55
    %95 = vmatpush.msra.mxu0 %v53
    %96 = vmatmul.f32.gmra.mxu0 %v71
    %v97 = vpop.f32.mrf.mxu0
    %v98 = vadd.f32 %v65, %v97
    %99 = vdwg.mxu0
    %100 = vmatpush.msra.mxu0 0.0
    %101 = vmatpush.msra.mxu0 0.0
    %102 = vmatpush.msra.mxu0 0.0
    %103 = vmatpush.msra.mxu0 0.0
    %104 = vmatpush.msra.mxu0 0.0
    %105 = vmatpush.msra.mxu0 0.0
    %106 = vmatpush.msra.mxu0 0.0
    %107 = vmatpush.msra.mxu0 0.0
    %108 = vmatpush.msra.mxu0 0.0
    %109 = vmatpush.msra.mxu0 0.0
    %110 = vmatpush.msra.mxu0 0.0
    %111 = vmatpush.msra.mxu0 %v78
    %112 = vmatpush.msra.mxu0 %v60
    %113 = vmatpush.msra.mxu0 %v58
    %114 = vmatpush.msra.mxu0 %v56
    %115 = vmatpush.msra.mxu0 %v54
    %116 = vmatmul.f32.gmra.mxu0 %v71
    %v117 = vpop.f32.mrf.mxu0
    %v118 = vadd.f32 %v66, %v117
    %119 = vdwg.mxu0
    %s120 = scalar_lea.vmem [#allocation2], 80
    %v121 = vld [vmem:[%s120] sm:$0xff]
    %v122 = vld [vmem:[%s120 + $0x8] sm:$0xff]
    %v123 = vld [vmem:[%s120 + $0x10] sm:$0xff]
    %v124 = vld [vmem:[%s120 + $0x18] sm:$0xff]
    %v125 = vld [vmem:[%s120 + $0x20] sm:$0xff]
    %v126 = vld [vmem:[%s120 + $0x28] sm:$0xff]
    %v127 = vld [vmem:[%s120 + $0x30] sm:$0xff]
    %v128 = vld [vmem:[%s120 + $0x38] sm:$0xff]
    %v129 = vld [vmem:[%s120 + $0x40] sm:$0xf]
    %v130 = vld [vmem:[%s120 + $0x48] sm:$0xf]
    %s131 = scalar_lea.vmem %s2, 2
    %v132 = vld [vmem:[%s131] sm:$0x3]
    %v134 = vperm.slane %v132, 0
    %v135 = vperm.slane %v132, 1
    %v139 = vsel %vm73, %v129, 0
    %v142 = vsel %vm73, %v130, 0
    %144 = vmatpush.msra.mxu0 0.0
    %145 = vmatpush.msra.mxu0 0.0
    %146 = vmatpush.msra.mxu0 0.0
    %147 = vmatpush.msra.mxu0 0.0
    %148 = vmatpush.msra.mxu0 0.0
    %149 = vmatpush.msra.mxu0 0.0
    %150 = vmatpush.msra.mxu0 0.0
    %151 = vmatpush.msra.mxu0 0.0
    %152 = vmatpush.msra.mxu0 0.0
    %153 = vmatpush.msra.mxu0 0.0
    %154 = vmatpush.msra.mxu0 0.0
    %155 = vmatpush.msra.mxu0 %v139
    %156 = vmatpush.msra.mxu0 %v127
    %157 = vmatpush.msra.mxu0 %v125
    %158 = vmatpush.msra.mxu0 %v123
    %159 = vmatpush.msra.mxu0 %v121
    %160 = vmatmul.f32.gmra.mxu0 %v71
    %v161 = vpop.f32.mrf.mxu0
    %v162 = vadd.f32 %v134, %v161
    %163 = vdwg.mxu0
    %164 = vmatpush.msra.mxu0 0.0
    %165 = vmatpush.msra.mxu0 0.0
    %166 = vmatpush.msra.mxu0 0.0
    %167 = vmatpush.msra.mxu0 0.0
    %168 = vmatpush.msra.mxu0 0.0
    %169 = vmatpush.msra.mxu0 0.0
    %170 = vmatpush.msra.mxu0 0.0
    %171 = vmatpush.msra.mxu0 0.0
    %172 = vmatpush.msra.mxu0 0.0
    %173 = vmatpush.msra.mxu0 0.0
    %174 = vmatpush.msra.mxu0 0.0
    %175 = vmatpush.msra.mxu0 %v142
    %176 = vmatpush.msra.mxu0 %v128
    %177 = vmatpush.msra.mxu0 %v126
    %178 = vmatpush.msra.mxu0 %v124
    %179 = vmatpush.msra.mxu0 %v122
    %180 = vmatmul.f32.gmra.mxu0 %v71
    %v181 = vpop.f32.mrf.mxu0
    %v182 = vadd.f32 %v135, %v181
    %183 = vdwg.mxu0
    %s184 = scalar_lea.vmem [#allocation2], 160
    %v185 = vld [vmem:[%s184] sm:$0xff]
    %v186 = vld [vmem:[%s184 + $0x8] sm:$0xff]
    %v187 = vld [vmem:[%s184 + $0x10] sm:$0xff]
    %v188 = vld [vmem:[%s184 + $0x18] sm:$0xff]
    %v189 = vld [vmem:[%s184 + $0x20] sm:$0xff]
    %v190 = vld [vmem:[%s184 + $0x28] sm:$0xff]
    %v191 = vld [vmem:[%s184 + $0x30] sm:$0xff]
    %v192 = vld [vmem:[%s184 + $0x38] sm:$0xff]
    %v193 = vld [vmem:[%s184 + $0x40] sm:$0xf]
    %v194 = vld [vmem:[%s184 + $0x48] sm:$0xf]
    %s195 = scalar_lea.vmem %s2, 4
    %v196 = vld [vmem:[%s195] sm:$0x3]
    %v198 = vperm.slane %v196, 0
    %v199 = vperm.slane %v196, 1
    %v203 = vsel %vm73, %v193, 0
    %v206 = vsel %vm73, %v194, 0
    %208 = vmatpush.msra.mxu0 0.0
    %209 = vmatpush.msra.mxu0 0.0
    %210 = vmatpush.msra.mxu0 0.0
    %211 = vmatpush.msra.mxu0 0.0
    %212 = vmatpush.msra.mxu0 0.0
    %213 = vmatpush.msra.mxu0 0.0
    %214 = vmatpush.msra.mxu0 0.0
    %215 = vmatpush.msra.mxu0 0.0
    %216 = vmatpush.msra.mxu0 0.0
    %217 = vmatpush.msra.mxu0 0.0
    %218 = vmatpush.msra.mxu0 0.0
    %219 = vmatpush.msra.mxu0 %v203
    %220 = vmatpush.msra.mxu0 %v191
    %221 = vmatpush.msra.mxu0 %v189
    %222 = vmatpush.msra.mxu0 %v187
    %223 = vmatpush.msra.mxu0 %v185
    %224 = vmatmul.f32.gmra.mxu0 %v71
    %v225 = vpop.f32.mrf.mxu0
    %v226 = vadd.f32 %v198, %v225
    %227 = vdwg.mxu0
    %228 = vmatpush.msra.mxu0 0.0
    %229 = vmatpush.msra.mxu0 0.0
    %230 = vmatpush.msra.mxu0 0.0
    %231 = vmatpush.msra.mxu0 0.0
    %232 = vmatpush.msra.mxu0 0.0
    %233 = vmatpush.msra.mxu0 0.0
    %234 = vmatpush.msra.mxu0 0.0
    %235 = vmatpush.msra.mxu0 0.0
    %236 = vmatpush.msra.mxu0 0.0
    %237 = vmatpush.msra.mxu0 0.0
    %238 = vmatpush.msra.mxu0 0.0
    %239 = vmatpush.msra.mxu0 %v206
    %240 = vmatpush.msra.mxu0 %v192
    %241 = vmatpush.msra.mxu0 %v190
    %242 = vmatpush.msra.mxu0 %v188
    %243 = vmatpush.msra.mxu0 %v186
    %244 = vmatmul.f32.gmra.mxu0 %v71
    %v245 = vpop.f32.mrf.mxu0
    %v246 = vadd.f32 %v199, %v245
    %247 = vdwg.mxu0
    %v248 = vld [vmem:[#allocation4] sm:$0xff]
    %v249 = vld [vmem:[#allocation4 + $0x8] sm:$0xff]
    %v250 = vld [vmem:[#allocation4 + $0x10] sm:$0xff]
    %v251 = vld [vmem:[#allocation4 + $0x18] sm:$0xff]
    %v252 = vld [vmem:[#allocation4 + $0x20] sm:$0xff]
    %v253 = vld [vmem:[#allocation4 + $0x28] sm:$0xff]
    %v254 = vld [vmem:[#allocation4 + $0x30] sm:$0xff]
    %v255 = vld [vmem:[#allocation4 + $0x38] sm:$0xff]
    %v256 = vld [vmem:[#allocation4 + $0x40] sm:$0xf]
    %v257 = vld [vmem:[#allocation4 + $0x48] sm:$0xf]
    %v258 = vld [vmem:[%s4] sm:$0x3]
    %v260 = vperm.slane %v258, 0
    %v261 = vperm.slane %v258, 1
    %v265 = vsel %vm73, %v256, 0
    %v268 = vsel %vm73, %v257, 0
    %270 = vmatpush.msra.mxu0 0.0
    %271 = vmatpush.msra.mxu0 0.0
    %272 = vmatpush.msra.mxu0 0.0
    %273 = vmatpush.msra.mxu0 0.0
    %274 = vmatpush.msra.mxu0 0.0
    %275 = vmatpush.msra.mxu0 0.0
    %276 = vmatpush.msra.mxu0 0.0
    %277 = vmatpush.msra.mxu0 0.0
    %278 = vmatpush.msra.mxu0 0.0
    %279 = vmatpush.msra.mxu0 0.0
    %280 = vmatpush.msra.mxu0 0.0
    %281 = vmatpush.msra.mxu0 %v265
    %282 = vmatpush.msra.mxu0 %v254
    %283 = vmatpush.msra.mxu0 %v252
    %284 = vmatpush.msra.mxu0 %v250
    %285 = vmatpush.msra.mxu0 %v248
    %286 = vmatmul.f32.gmra.mxu0 %v71
    %v287 = vpop.f32.mrf.mxu0
    %v288 = vadd.f32 %v260, %v287
    %289 = vdwg.mxu0
    %290 = vmatpush.msra.mxu0 0.0
    %291 = vmatpush.msra.mxu0 0.0
    %292 = vmatpush.msra.mxu0 0.0
    %293 = vmatpush.msra.mxu0 0.0
    %294 = vmatpush.msra.mxu0 0.0
    %295 = vmatpush.msra.mxu0 0.0
    %296 = vmatpush.msra.mxu0 0.0
    %297 = vmatpush.msra.mxu0 0.0
    %298 = vmatpush.msra.mxu0 0.0
    %299 = vmatpush.msra.mxu0 0.0
    %300 = vmatpush.msra.mxu0 0.0
    %301 = vmatpush.msra.mxu0 %v268
    %302 = vmatpush.msra.mxu0 %v255
    %303 = vmatpush.msra.mxu0 %v253
    %304 = vmatpush.msra.mxu0 %v251
    %305 = vmatpush.msra.mxu0 %v249
    %306 = vmatmul.f32.gmra.mxu0 %v71
    %v307 = vpop.f32.mrf.mxu0
    %v308 = vadd.f32 %v261, %v307
    %309 = vdwg.mxu0
    %v310 = vmul.f32 %v98, %v162
    %v311 = vmul.f32 %v118, %v182
    %v312 = vadd.f32 %v288, %v310
    %v313 = vadd.f32 %v308, %v311
    %v314 = vmul.f32 %v162, %v226
    %v315 = vmul.f32 %v182, %v246
    %v316 = vadd.f32 %v312, %v314
    %v317 = vadd.f32 %v313, %v315
    %v318 = vmax.f32 %v316, 0.0
    %v319 = vmax.f32 %v317, 0.0
    %v322 = vrot.slane %v319, 6
    %vm323 = vcmask 1041408
    %v324 = vsel %vm323, %v318, %v322
    %vm326 = vcmask 125954
    %vm327 = vmor %vm326, %vm323
    %328 = vst.msk [vmem:[%s5] sm:$0xf] %vm327, %v324
    // Predicated region
    $region30: #{chebgac_forward.1} parent=1 // pred_check
      _
    $region31: #{chebgac_forward.1} parent=1 // pred_check_branch
      %330 = sbr.rel (0) target = $region33
    $region32: #{chebgac_forward.1} parent=1 // pred_region
      _
    $region33: #{chebgac_forward.1} parent=1 // pred_fallthru
      _
    // Predicated region
    $region34: #{chebgac_forward.1} parent=1 // pred_check
      _
    $region35: #{chebgac_forward.1} parent=1 // pred_check_branch
      %332 = sbr.rel (0) target = $region37
    $region36: #{chebgac_forward.1} parent=1 // pred_region
      _
    $region37: #{chebgac_forward.1} parent=1 // pred_fallthru
      _
    %333 = vsyncpa [#allocation3], 1
    %334 = vsyncpa [#allocation5], 1

</llo_original>
